<compile_context>
chip_gen: v6e
topology: v6e:2x2x1
jax: 0.10.0
libtpu: 0.0.40
codegen_flags: <defaults>
</compile_context>

<pallas_src>
import functools

import jax
import jax.numpy as jnp
from jax.experimental import pallas as pl
from jax.experimental.pallas import tpu as pltpu


def _round_up(x, m):
    return (x + m - 1) // m * m


# ----------------------------- Pallas kernel --------------------------------
def bert_embeddings_kernel(ids_ref, type_ids_ref,
                           word_tab_ref, pos_tab_ref, type_tab_ref,
                           gamma_ref, beta_ref, w_ref, b_ref,
                           out_ref, *, eps, seq_len):
    tm = ids_ref.shape[0]
    n_vocab = word_tab_ref.shape[0]
    n_pos = pos_tab_ref.shape[0]
    n_typ = type_tab_ref.shape[0]

    # ---- in-kernel embedding gathers: bf16 one-hot x resident bf16 table -> f32 rows ----
    word_oh = (ids_ref[...] ==
               jax.lax.broadcasted_iota(jnp.int32, (tm, n_vocab), 1)).astype(jnp.bfloat16)
    we = jnp.dot(word_oh, word_tab_ref[...], preferred_element_type=jnp.float32)

    # Position ids synthesized for the position_ids=None default: pos = flat_row % seq_len.
    # Vector integer mod done via f32 div + floor, with a +/-1 correction guard
    # (avoids relying on vector integer division).
    row = pl.program_id(0) * tm + jax.lax.broadcasted_iota(jnp.int32, (tm, 1), 0)
    q = jnp.floor(row.astype(jnp.float32) / float(seq_len)).astype(jnp.int32)
    pos = row - q * seq_len
    pos = jnp.where(pos < 0, pos + seq_len, pos)
    pos = jnp.where(pos >= seq_len, pos - seq_len, pos)
    pos_oh = (pos ==
              jax.lax.broadcasted_iota(jnp.int32, (tm, n_pos), 1)).astype(jnp.bfloat16)
    pe = jnp.dot(pos_oh, pos_tab_ref[...], preferred_element_type=jnp.float32)

    typ_oh = (type_ids_ref[...] ==
              jax.lax.broadcasted_iota(jnp.int32, (tm, n_typ), 1)).astype(jnp.bfloat16)
    te = jnp.dot(typ_oh, type_tab_ref[...], preferred_element_type=jnp.float32)

    x = we + pe + te                                       # (TM, E) f32

    # LayerNorm over the embedding axis (biased variance, like torch.nn.LayerNorm); f32 math.
    mean = jnp.mean(x, axis=-1, keepdims=True)
    c = x - mean
    var = jnp.mean(c * c, axis=-1, keepdims=True)
    y = c * jax.lax.rsqrt(var + eps) * gamma_ref[...] + beta_ref[...]

    # TODO(synk): dropout is identity here (inference / eval mode); training-mode dropout
    # would use pltpu.prng_seed + pltpu.prng_random_bits.

    # mapping_layer: Linear(E -> H_pad): bf16 operands, f32 MXU accumulation, bf16 store.
    out_ref[...] = (
        jnp.dot(y.astype(jnp.bfloat16), w_ref[...], preferred_element_type=jnp.float32)
        + b_ref[...]
    ).astype(out_ref.dtype)


# ----------------------------- pallas_call wrapper ---------------------------
def bert_embeddings_pallas(ids, type_ids, seq_len,
                           word_table, pos_table, type_table,
                           ln_gamma, ln_beta, map_w_t, map_b, eps,
                           *, row_tile=1024):
    """ids/type_ids: (N, 1) i32; word/pos/type tables: (*_pad, E) bf16 (VMEM-resident);
    ln_gamma/ln_beta: (1, E) f32; map_w_t: (E, H_pad) bf16; map_b: (1, H_pad) f32.
    Returns the padded (N_pad, H_pad) bf16 output; the caller slices padding away."""
    N = ids.shape[0]
    E = word_table.shape[1]
    H_pad = map_w_t.shape[1]
    v_pad = word_table.shape[0]
    p_pad = pos_table.shape[0]
    t_pad = type_table.shape[0]

    # Row tile: 16-aligned (bf16 output native sublane tiling), large by default.  If the
    # grid would otherwise be a single step, halve the tile so both v7x TensorCores get work.
    TM = min(row_tile, _round_up(max(N, 16), 16))
    if _round_up(N, TM) // TM < 2 and TM > 16:
        TM = _round_up(TM // 2, 16)
    N_pad = _round_up(N, TM)
    if N_pad != N:
        pad = N_pad - N
        ids = jnp.pad(ids, ((0, pad), (0, 0)))
        type_ids = jnp.pad(type_ids, ((0, pad), (0, 0)))
    grid = (N_pad // TM,)

    # ---- VMEM budget: double-buffered per-step blocks + resident params + scratch headroom ----
    def _padded_bytes(shape, dtype):
        r = _round_up(int(shape[0]), 8)
        c = _round_up(int(shape[1]), 128)
        return r * c * jnp.dtype(dtype).itemsize

    per_step = (2 * _padded_bytes((TM, 1), jnp.int32)
                + _padded_bytes((TM, H_pad), jnp.bfloat16))
    resident = (_padded_bytes(word_table.shape, word_table.dtype)
                + _padded_bytes(pos_table.shape, pos_table.dtype)
                + _padded_bytes(type_table.shape, type_table.dtype)
                + 2 * _padded_bytes((1, E), jnp.float32)
                + _padded_bytes((E, H_pad), map_w_t.dtype)
                + _padded_bytes((1, H_pad), jnp.float32))
    scratch = (_padded_bytes((TM, v_pad), jnp.bfloat16)
               + _padded_bytes((TM, p_pad), jnp.bfloat16)
               + _padded_bytes((TM, t_pad), jnp.bfloat16)
               + 6 * _padded_bytes((TM, E), jnp.float32))
    computed = 2 * per_step + 2 * resident + scratch + (4 << 20)

    # Chip-derived VMEM cap (v7x has only 64 MiB/TC; v5e/v6e have 128 MiB).
    vmem_cap = 64 << 20
    info_fn = getattr(pltpu, "get_tpu_info", None)
    if info_fn is not None:
        try:
            vmem_cap = int(info_fn().vmem_capacity_bytes)
        except Exception:
            pass
    vmem_limit = int(min(max(computed, 16 << 20), int(0.6 * vmem_cap)))

    kernel = functools.partial(bert_embeddings_kernel, eps=eps, seq_len=int(seq_len))

    def row_spec(cols):
        return pl.BlockSpec((TM, cols), lambda i: (i, 0))

    def resident_spec(shape):
        return pl.BlockSpec(shape, lambda i: (0, 0))

    out = pl.pallas_call(
        kernel,
        out_shape=jax.ShapeDtypeStruct((N_pad, H_pad), jnp.bfloat16),
        grid=grid,
        in_specs=[
            row_spec(1),                        # word ids                 (TM, 1) i32
            row_spec(1),                        # token-type ids           (TM, 1) i32
            resident_spec(word_table.shape),    # word table  (VMEM-resident, bf16)
            resident_spec(pos_table.shape),     # position table (bf16)
            resident_spec(type_table.shape),    # token-type table (bf16)
            resident_spec((1, E)),              # LayerNorm gamma (f32)
            resident_spec((1, E)),              # LayerNorm beta (f32)
            resident_spec((E, H_pad)),          # mapping weight (bf16, transposed)
            resident_spec((1, H_pad)),          # mapping bias (f32)
        ],
        out_specs=row_spec(H_pad),
        compiler_params=pltpu.CompilerParams(
            dimension_semantics=("parallel",),
            vmem_limit_bytes=vmem_limit),
    )(ids, type_ids, word_table, pos_table, type_table,
      ln_gamma, ln_beta, map_w_t, map_b)

    return out    # padded (N_pad, H_pad) bf16; caller slices once


# ----------------------------- Module wrapper --------------------------------
class BertEmbeddingsJax:
    """Deterministic synthetic parameters matching the PyTorch module's shapes
    (embedding_size != hidden_size, so mapping_layer is applied, as in the spec)."""

    def __init__(self, key, vocab_size=50, embedding_size=32, hidden_size=64,
                 max_position_embeddings=16, type_vocab_size=2,
                 pad_token_id=0, layer_norm_eps=1e-12):
        k = jax.random.split(key, 5)
        self.embedding_size = embedding_size
        self.hidden_size = hidden_size
        self.eps = layer_norm_eps

        # --- master f32 parameters (PyTorch-equivalent) ---
        self.word_embeddings = 0.02 * jax.random.normal(
            k[0], (vocab_size, embedding_size), jnp.float32)
        self.word_embeddings = self.word_embeddings.at[pad_token_id].set(0.0)  # padding_idx row
        self.position_embeddings = 0.02 * jax.random.normal(
            k[1], (max_position_embeddings, embedding_size), jnp.float32)
        self.token_type_embeddings = 0.02 * jax.random.normal(
            k[2], (type_vocab_size, embedding_size), jnp.float32)

        self.ln_gamma = jnp.ones((1, embedding_size), jnp.float32)
        self.ln_beta = jnp.zeros((1, embedding_size), jnp.float32)

        # nn.Linear(E, H): weight (H, E), bias (H,).  Stored transposed (E, H) in f32.
        self.map_w_t = 0.02 * jax.random.normal(
            k[3], (embedding_size, hidden_size), jnp.float32)
        self.map_b = 0.02 * jax.random.normal(k[4], (hidden_size,), jnp.float32)

        # --- kernel-side parameter copies: padded, bf16 where it halves HBM traffic ---
        v_pad = _round_up(vocab_size, 8)
        p_pad = _round_up(max_position_embeddings, 8)
        t_pad = _round_up(type_vocab_size, 8)
        h_pad = _round_up(hidden_size, 128)              # lane-dense output stores
        self.h_pad = h_pad
        self.word_table_k = (jnp.zeros((v_pad, embedding_size), jnp.float32)
                             .at[:vocab_size].set(self.word_embeddings)
                             .astype(jnp.bfloat16))
        self.pos_table_k = (jnp.zeros((p_pad, embedding_size), jnp.float32)
                            .at[:max_position_embeddings].set(self.position_embeddings)
                            .astype(jnp.bfloat16))
        self.type_table_k = (jnp.zeros((t_pad, embedding_size), jnp.float32)
                             .at[:type_vocab_size].set(self.token_type_embeddings)
                             .astype(jnp.bfloat16))
        self.map_w_t_k = (jnp.zeros((embedding_size, h_pad), jnp.float32)
                          .at[:, :hidden_size].set(self.map_w_t).astype(jnp.bfloat16))
        self.map_b_k = jnp.zeros((1, h_pad), jnp.float32).at[0, :hidden_size].set(self.map_b)

    def __call__(self, input_ids, token_type_ids=None, position_ids=None):
        if position_ids is not None:
            # TODO(synk): explicit position_ids not supported by the Pallas path; the kernel
            # synthesizes the default arange(seq) positions (module's position_ids=None path).
            raise NotImplementedError("explicit position_ids not supported")
        B, S = input_ids.shape
        if token_type_ids is None:
            token_type_ids = jnp.zeros((B, S), jnp.int32)

        # Only int32 ids cross HBM; all gathers happen in-kernel against resident tables.
        ids = input_ids.reshape(-1, 1).astype(jnp.int32)            # (N, 1)
        type_ids = token_type_ids.reshape(-1, 1).astype(jnp.int32)  # (N, 1)

        out = bert_embeddings_pallas(
            ids, type_ids, S,
            self.word_table_k, self.pos_table_k, self.type_table_k,
            self.ln_gamma, self.ln_beta,
            self.map_w_t_k, self.map_b_k, self.eps)
        # Single slice of the padded bf16 output (kept bf16 so a consumer reads half the bytes).
        return out[:B * S, :self.hidden_size].reshape(B, S, self.hidden_size)


# ----------------------------- reference (pure JAX, f32) ----------------------
def reference_forward(mod: BertEmbeddingsJax, input_ids, token_type_ids=None):
    B, S = input_ids.shape
    pos = jnp.arange(S, dtype=jnp.int32)[None, :]
    if token_type_ids is None:
        token_type_ids = jnp.zeros((B, S), jnp.int32)
    x = (jnp.take(mod.word_embeddings, input_ids, axis=0)
         + jnp.take(mod.position_embeddings, pos, axis=0)
         + jnp.take(mod.token_type_embeddings, token_type_ids, axis=0))
    mean = jnp.mean(x, axis=-1, keepdims=True)
    var = jnp.mean((x - mean) ** 2, axis=-1, keepdims=True)
    xn = (x - mean) / jnp.sqrt(var + mod.eps)
    y = xn * mod.ln_gamma.reshape(-1) + mod.ln_beta.reshape(-1)
    return y @ mod.map_w_t + mod.map_b


if __name__ == "__main__":
    key = jax.random.PRNGKey(0)
    mod = BertEmbeddingsJax(key)

    B, S = 2, 8
    input_ids = jax.random.randint(jax.random.PRNGKey(1), (B, S), 0, 50, dtype=jnp.int32)
    token_type_ids = jax.random.randint(jax.random.PRNGKey(2), (B, S), 0, 2, dtype=jnp.int32)

    out = mod(input_ids, token_type_ids=token_type_ids)
    out = jax.block_until_ready(out)

    ref = reference_forward(mod, input_ids, token_type_ids)
    assert out.shape == (B, S, mod.hidden_size)
    assert out.dtype == jnp.bfloat16
    # bf16 tables / weights / output vs the f32 reference -> widened tolerance.
    assert jnp.allclose(out.astype(jnp.float32), ref, atol=2e-2, rtol=2e-2), \
        "mismatch vs reference"

    print("KERNEL_OK")
</pallas_src>

<mosaic_0001>
module attributes {stable_mosaic.version = 11 : i64} {
  func.func @bert_embeddings_kernel(%arg0: i32, %arg1: memref<16x1xi32, #tpu.memory_space<vmem>>, %arg2: memref<16x1xi32, #tpu.memory_space<vmem>>, %arg3: memref<56x32xbf16, #tpu.memory_space<vmem>>, %arg4: memref<16x32xbf16, #tpu.memory_space<vmem>>, %arg5: memref<8x32xbf16, #tpu.memory_space<vmem>>, %arg6: memref<1x32xf32, #tpu.memory_space<vmem>>, %arg7: memref<1x32xf32, #tpu.memory_space<vmem>>, %arg8: memref<32x128xbf16, #tpu.memory_space<vmem>>, %arg9: memref<1x128xf32, #tpu.memory_space<vmem>>, %arg10: memref<16x128xbf16, #tpu.memory_space<vmem>>) attributes {dimension_semantics = [#tpu.dimension_semantics<parallel>], iteration_bounds = array<i64: 1>, scalar_prefetch = 0 : i64, scratch_operands = 0 : i64, tpu.core_type = #tpu.core_type<tc>, window_params = [{transform_indices = @transform_0, window_bounds = array<i64: 16, 1>}, {transform_indices = @transform_1, window_bounds = array<i64: 16, 1>}, {pipeline_mode = #tpu.pipeline_mode<synchronous>, transform_indices = @transform_2, window_bounds = array<i64: 56, 32>}, {pipeline_mode = #tpu.pipeline_mode<synchronous>, transform_indices = @transform_3, window_bounds = array<i64: 16, 32>}, {pipeline_mode = #tpu.pipeline_mode<synchronous>, transform_indices = @transform_4, window_bounds = array<i64: 8, 32>}, {pipeline_mode = #tpu.pipeline_mode<synchronous>, transform_indices = @transform_5, window_bounds = array<i64: 1, 32>}, {pipeline_mode = #tpu.pipeline_mode<synchronous>, transform_indices = @transform_6, window_bounds = array<i64: 1, 32>}, {pipeline_mode = #tpu.pipeline_mode<synchronous>, transform_indices = @transform_7, window_bounds = array<i64: 32, 128>}, {pipeline_mode = #tpu.pipeline_mode<synchronous>, transform_indices = @transform_8, window_bounds = array<i64: 1, 128>}, {transform_indices = @transform_9, window_bounds = array<i64: 16, 128>}]} {
    %c0 = arith.constant 0 : index
    %c0_0 = arith.constant 0 : index
    %0 = vector.load %arg1[%c0, %c0_0] : memref<16x1xi32, #tpu.memory_space<vmem>>, vector<16x1xi32>
    %1 = tpu.iota {dimensions = array<i32: 1>} : vector<16x56xi32>
    %2 = vector.broadcast %0 : vector<16x1xi32> to vector<16x56xi32>
    %3 = arith.cmpi eq, %2, %1 : vector<16x56xi32>
    %4 = arith.extui %3 : vector<16x56xi1> to vector<16x56xi32>
    %5 = arith.sitofp %4 : vector<16x56xi32> to vector<16x56xf32>
    %6 = arith.truncf %5 : vector<16x56xf32> to vector<16x56xbf16>
    %c0_1 = arith.constant 0 : index
    %c0_2 = arith.constant 0 : index
    %7 = vector.load %arg3[%c0_1, %c0_2] : memref<56x32xbf16, #tpu.memory_space<vmem>>, vector<56x32xbf16>
    %cst = arith.constant dense<0.000000e+00> : vector<16x32xf32>
    %8 = tpu.matmul %6, %7, %cst {dimension_numbers = #tpu.dot_dimension_numbers<[1], [0], [0], [1], [0, 0, 1, 1], [], []>} : vector<16x56xbf16>, vector<56x32xbf16>, vector<16x32xf32> -> vector<16x32xf32>
    %c16_i32 = arith.constant 16 : i32
    %9 = arith.muli %arg0, %c16_i32 : i32
    %10 = tpu.iota {dimensions = array<i32: 0>} : vector<16x1xi32>
    %11 = vector.broadcast %9 : i32 to vector<16x1xi32>
    %12 = arith.addi %11, %10 : vector<16x1xi32>
    %13 = arith.sitofp %12 : vector<16x1xi32> to vector<16x1xf32>
    %cst_3 = arith.constant 8.000000e+00 : f32
    %14 = vector.broadcast %cst_3 : f32 to vector<16x1xf32>
    %15 = arith.divf %13, %14 : vector<16x1xf32>
    %16 = math.floor %15 : vector<16x1xf32>
    %17 = arith.fptosi %16 : vector<16x1xf32> to vector<16x1xi32>
    %c8_i32 = arith.constant 8 : i32
    %18 = vector.broadcast %c8_i32 : i32 to vector<16x1xi32>
    %19 = arith.muli %17, %18 : vector<16x1xi32>
    %20 = arith.subi %12, %19 : vector<16x1xi32>
    %c0_i32 = arith.constant 0 : i32
    %21 = vector.broadcast %c0_i32 : i32 to vector<16x1xi32>
    %22 = arith.cmpi slt, %20, %21 : vector<16x1xi32>
    %c8_i32_4 = arith.constant 8 : i32
    %23 = vector.broadcast %c8_i32_4 : i32 to vector<16x1xi32>
    %24 = arith.addi %20, %23 : vector<16x1xi32>
    %25 = arith.select %22, %24, %20 : vector<16x1xi1>, vector<16x1xi32>
    %c8_i32_5 = arith.constant 8 : i32
    %26 = vector.broadcast %c8_i32_5 : i32 to vector<16x1xi32>
    %27 = arith.cmpi sge, %25, %26 : vector<16x1xi32>
    %c8_i32_6 = arith.constant 8 : i32
    %28 = vector.broadcast %c8_i32_6 : i32 to vector<16x1xi32>
    %29 = arith.subi %25, %28 : vector<16x1xi32>
    %30 = arith.select %27, %29, %25 : vector<16x1xi1>, vector<16x1xi32>
    %31 = tpu.iota {dimensions = array<i32: 1>} : vector<16x16xi32>
    %32 = vector.broadcast %30 : vector<16x1xi32> to vector<16x16xi32>
    %33 = arith.cmpi eq, %32, %31 : vector<16x16xi32>
    %34 = arith.extui %33 : vector<16x16xi1> to vector<16x16xi32>
    %35 = arith.sitofp %34 : vector<16x16xi32> to vector<16x16xf32>
    %36 = arith.truncf %35 : vector<16x16xf32> to vector<16x16xbf16>
    %c0_7 = arith.constant 0 : index
    %c0_8 = arith.constant 0 : index
    %37 = vector.load %arg4[%c0_7, %c0_8] : memref<16x32xbf16, #tpu.memory_space<vmem>>, vector<16x32xbf16>
    %cst_9 = arith.constant dense<0.000000e+00> : vector<16x32xf32>
    %38 = tpu.matmul %36, %37, %cst_9 {dimension_numbers = #tpu.dot_dimension_numbers<[1], [0], [0], [1], [0, 0, 1, 1], [], []>} : vector<16x16xbf16>, vector<16x32xbf16>, vector<16x32xf32> -> vector<16x32xf32>
    %c0_10 = arith.constant 0 : index
    %c0_11 = arith.constant 0 : index
    %39 = vector.load %arg2[%c0_10, %c0_11] : memref<16x1xi32, #tpu.memory_space<vmem>>, vector<16x1xi32>
    %40 = tpu.iota {dimensions = array<i32: 1>} : vector<16x8xi32>
    %41 = vector.broadcast %39 : vector<16x1xi32> to vector<16x8xi32>
    %42 = arith.cmpi eq, %41, %40 : vector<16x8xi32>
    %43 = arith.extui %42 : vector<16x8xi1> to vector<16x8xi32>
    %44 = arith.sitofp %43 : vector<16x8xi32> to vector<16x8xf32>
    %45 = arith.truncf %44 : vector<16x8xf32> to vector<16x8xbf16>
    %c0_12 = arith.constant 0 : index
    %c0_13 = arith.constant 0 : index
    %46 = vector.load %arg5[%c0_12, %c0_13] : memref<8x32xbf16, #tpu.memory_space<vmem>>, vector<8x32xbf16>
    %cst_14 = arith.constant dense<0.000000e+00> : vector<16x32xf32>
    %47 = tpu.matmul %45, %46, %cst_14 {dimension_numbers = #tpu.dot_dimension_numbers<[1], [0], [0], [1], [0, 0, 1, 1], [], []>} : vector<16x8xbf16>, vector<8x32xbf16>, vector<16x32xf32> -> vector<16x32xf32>
    %48 = arith.addf %8, %38 : vector<16x32xf32>
    %49 = arith.addf %48, %47 : vector<16x32xf32>
    %cst_15 = arith.constant dense<0.000000e+00> : vector<16xf32>
    %50 = vector.multi_reduction <add>, %49, %cst_15 [1] : vector<16x32xf32> to vector<16xf32>
    %51 = vector.shape_cast %50 : vector<16xf32> to vector<16x1xf32>
    %cst_16 = arith.constant 3.200000e+01 : f32
    %52 = vector.broadcast %cst_16 : f32 to vector<16x1xf32>
    %53 = arith.divf %51, %52 : vector<16x1xf32>
    %54 = vector.broadcast %53 : vector<16x1xf32> to vector<16x32xf32>
    %55 = arith.subf %49, %54 : vector<16x32xf32>
    %56 = arith.mulf %55, %55 : vector<16x32xf32>
    %cst_17 = arith.constant dense<0.000000e+00> : vector<16xf32>
    %57 = vector.multi_reduction <add>, %56, %cst_17 [1] : vector<16x32xf32> to vector<16xf32>
    %58 = vector.shape_cast %57 : vector<16xf32> to vector<16x1xf32>
    %cst_18 = arith.constant 3.200000e+01 : f32
    %59 = vector.broadcast %cst_18 : f32 to vector<16x1xf32>
    %60 = arith.divf %58, %59 : vector<16x1xf32>
    %cst_19 = arith.constant 9.99999996E-13 : f32
    %61 = vector.broadcast %cst_19 : f32 to vector<16x1xf32>
    %62 = arith.addf %60, %61 : vector<16x1xf32>
    %63 = math.rsqrt %62 : vector<16x1xf32>
    %64 = vector.broadcast %63 : vector<16x1xf32> to vector<16x32xf32>
    %65 = arith.mulf %55, %64 : vector<16x32xf32>
    %c0_20 = arith.constant 0 : index
    %c0_21 = arith.constant 0 : index
    %66 = vector.load %arg6[%c0_20, %c0_21] : memref<1x32xf32, #tpu.memory_space<vmem>>, vector<1x32xf32>
    %67 = vector.broadcast %66 : vector<1x32xf32> to vector<16x32xf32>
    %68 = arith.mulf %65, %67 : vector<16x32xf32>
    %c0_22 = arith.constant 0 : index
    %c0_23 = arith.constant 0 : index
    %69 = vector.load %arg7[%c0_22, %c0_23] : memref<1x32xf32, #tpu.memory_space<vmem>>, vector<1x32xf32>
    %70 = vector.broadcast %69 : vector<1x32xf32> to vector<16x32xf32>
    %71 = arith.addf %68, %70 : vector<16x32xf32>
    %72 = arith.truncf %71 : vector<16x32xf32> to vector<16x32xbf16>
    %c0_24 = arith.constant 0 : index
    %c0_25 = arith.constant 0 : index
    %73 = vector.load %arg8[%c0_24, %c0_25] : memref<32x128xbf16, #tpu.memory_space<vmem>>, vector<32x128xbf16>
    %cst_26 = arith.constant dense<0.000000e+00> : vector<16x128xf32>
    %74 = tpu.matmul %72, %73, %cst_26 {dimension_numbers = #tpu.dot_dimension_numbers<[1], [0], [0], [1], [0, 0, 1, 1], [], []>} : vector<16x32xbf16>, vector<32x128xbf16>, vector<16x128xf32> -> vector<16x128xf32>
    %c0_27 = arith.constant 0 : index
    %c0_28 = arith.constant 0 : index
    %75 = vector.load %arg9[%c0_27, %c0_28] : memref<1x128xf32, #tpu.memory_space<vmem>>, vector<1x128xf32>
    %76 = vector.broadcast %75 : vector<1x128xf32> to vector<16x128xf32>
    %77 = arith.addf %74, %76 : vector<16x128xf32>
    %78 = arith.truncf %77 : vector<16x128xf32> to vector<16x128xbf16>
    %c0_29 = arith.constant 0 : index
    %c0_30 = arith.constant 0 : index
    %79 = vector.load %arg10[%c0_29, %c0_30] : memref<16x128xbf16, #tpu.memory_space<vmem>>, vector<16x128xbf16>
    tpu.vector_store %arg10[%c0_29, %c0_30], %78 {strides = array<i32>} : memref<16x128xbf16, #tpu.memory_space<vmem>>, vector<16x128xbf16>,
    return
  }
  func.func @transform_0(%arg0: i32) -> (i32, i32) {
    %c0_i32 = arith.constant 0 : i32
    %c0_i32_0 = arith.constant 0 : i32
    return %arg0, %c0_i32 : i32, i32
  }
  func.func @transform_1(%arg0: i32) -> (i32, i32) {
    %c0_i32 = arith.constant 0 : i32
    %c0_i32_0 = arith.constant 0 : i32
    return %arg0, %c0_i32 : i32, i32
  }
  func.func @transform_2(%arg0: i32) -> (i32, i32) {
    %c0_i32 = arith.constant 0 : i32
    %c0_i32_0 = arith.constant 0 : i32
    %c0_i32_1 = arith.constant 0 : i32
    return %c0_i32, %c0_i32_0 : i32, i32
  }
  func.func @transform_3(%arg0: i32) -> (i32, i32) {
    %c0_i32 = arith.constant 0 : i32
    %c0_i32_0 = arith.constant 0 : i32
    %c0_i32_1 = arith.constant 0 : i32
    return %c0_i32, %c0_i32_0 : i32, i32
  }
  func.func @transform_4(%arg0: i32) -> (i32, i32) {
    %c0_i32 = arith.constant 0 : i32
    %c0_i32_0 = arith.constant 0 : i32
    %c0_i32_1 = arith.constant 0 : i32
    return %c0_i32, %c0_i32_0 : i32, i32
  }
  func.func @transform_5(%arg0: i32) -> (i32, i32) {
    %c0_i32 = arith.constant 0 : i32
    %c0_i32_0 = arith.constant 0 : i32
    %c0_i32_1 = arith.constant 0 : i32
    return %c0_i32, %c0_i32_0 : i32, i32
  }
  func.func @transform_6(%arg0: i32) -> (i32, i32) {
    %c0_i32 = arith.constant 0 : i32
    %c0_i32_0 = arith.constant 0 : i32
    %c0_i32_1 = arith.constant 0 : i32
    return %c0_i32, %c0_i32_0 : i32, i32
  }
  func.func @transform_7(%arg0: i32) -> (i32, i32) {
    %c0_i32 = arith.constant 0 : i32
    %c0_i32_0 = arith.constant 0 : i32
    %c0_i32_1 = arith.constant 0 : i32
    return %c0_i32, %c0_i32_0 : i32, i32
  }
  func.func @transform_8(%arg0: i32) -> (i32, i32) {
    %c0_i32 = arith.constant 0 : i32
    %c0_i32_0 = arith.constant 0 : i32
    %c0_i32_1 = arith.constant 0 : i32
    return %c0_i32, %c0_i32_0 : i32, i32
  }
  func.func @transform_9(%arg0: i32) -> (i32, i32) {
    %c0_i32 = arith.constant 0 : i32
    %c0_i32_0 = arith.constant 0 : i32
    return %arg0, %c0_i32 : i32, i32
  }
}

</mosaic_0001>

<llo_original>
// kernel: tpu_custom_call.1
$region0: #{tpu_custom_call.1}
  #allocation0 [shape = 'u32[]', space=smem, size = 0x4, offset = 0x4, fixed_abs, tag = 'smem constant byte address 0x4 - core index']
  #allocation1 [shape = 'u32[144,128]{1,0:T(1,128)}', space=vmem, size = 0x12000, scoped, tag = 'internal scratch']
  %s0 = inlined_call_operand.vmem [shape: s32[16,1], index: 0, kind: input, shape index: {}]
  %s1 = inlined_call_operand.vmem [shape: s32[16,1], index: 1, kind: input, shape index: {}]
  %s2 = inlined_call_operand.vmem [shape: bf16[56,32], index: 2, kind: input, shape index: {}]
  %s3 = inlined_call_operand.vmem [shape: bf16[16,32], index: 3, kind: input, shape index: {}]
  %s4 = inlined_call_operand.vmem [shape: bf16[8,32], index: 4, kind: input, shape index: {}]
  %s5 = inlined_call_operand.vmem [shape: f32[1,32], index: 5, kind: input, shape index: {}]
  %s6 = inlined_call_operand.vmem [shape: f32[1,32], index: 6, kind: input, shape index: {}]
  %s7 = inlined_call_operand.vmem [shape: bf16[32,128], index: 7, kind: input, shape index: {}]
  %s8 = inlined_call_operand.vmem [shape: f32[1,128], index: 8, kind: input, shape index: {}]
  %s9 = inlined_call_operand.hbm [shape: bf16[16,128], index: 9, kind: output, shape index: {}]
  %s10 = sld [smem:[#allocation0]]
  $region46: #{tpu_custom_call.1} parent=0
    _
  %s12 = ssub.s32 1, %s10
  %s13 = scalar_select 0, %s12, %s10
  $region1: #{tpu_custom_call.1} parent=0
    #allocation2 [shape = 'u8[4096]{0}', space=vmem, size = 0x1000, scoped, tag = 'output window, operand 0, single buffered']
    #allocation3 [shape = 's32[1]{0}', space=sflag, size = 0x4, scoped, tag = 'scoped memory for tpu_custom_call.1']
    %14 = vsyncpa [#allocation3], 0
    // Predicated region
    $region2: #{tpu_custom_call.1} parent=1 // pred_check
      _
    $region3: #{tpu_custom_call.1} parent=1 // pred_check_branch
      %16 = sbr.rel (0) target = $region5
    $region4: #{tpu_custom_call.1} parent=1 // pred_region
      _
    $region5: #{tpu_custom_call.1} parent=1 // pred_fallthru
      _
    // Predicated region
    $region6: #{tpu_custom_call.1} parent=1 // pred_check
      _
    $region7: #{tpu_custom_call.1} parent=1 // pred_check_branch
      %18 = sbr.rel (0) target = $region9
    $region8: #{tpu_custom_call.1} parent=1 // pred_region
      _
    $region9: #{tpu_custom_call.1} parent=1 // pred_fallthru
      _
    // Predicated region
    $region10: #{tpu_custom_call.1} parent=1 // pred_check
      _
    $region11: #{tpu_custom_call.1} parent=1 // pred_check_branch
      %20 = sbr.rel (0) target = $region13
    $region12: #{tpu_custom_call.1} parent=1 // pred_region
      _
    $region13: #{tpu_custom_call.1} parent=1 // pred_fallthru
      _
    // Predicated region
    $region14: #{tpu_custom_call.1} parent=1 // pred_check
      _
    $region15: #{tpu_custom_call.1} parent=1 // pred_check_branch
      %22 = sbr.rel (0) target = $region17
    $region16: #{tpu_custom_call.1} parent=1 // pred_region
      _
    $region17: #{tpu_custom_call.1} parent=1 // pred_fallthru
      _
    // Predicated region
    $region18: #{tpu_custom_call.1} parent=1 // pred_check
      _
    $region19: #{tpu_custom_call.1} parent=1 // pred_check_branch
      %24 = sbr.rel (0) target = $region21
    $region20: #{tpu_custom_call.1} parent=1 // pred_region
      _
    $region21: #{tpu_custom_call.1} parent=1 // pred_fallthru
      _
    // Predicated region
    $region22: #{tpu_custom_call.1} parent=1 // pred_check
      _
    $region23: #{tpu_custom_call.1} parent=1 // pred_check_branch
      %26 = sbr.rel (0) target = $region25
    $region24: #{tpu_custom_call.1} parent=1 // pred_region
      _
    $region25: #{tpu_custom_call.1} parent=1 // pred_fallthru
      _
    // Predicated region
    $region26: #{tpu_custom_call.1} parent=1 // pred_check
      _
    $region27: #{tpu_custom_call.1} parent=1 // pred_check_branch
      %28 = sbr.rel (0) target = $region29
    $region28: #{tpu_custom_call.1} parent=1 // pred_region
      _
    $region29: #{tpu_custom_call.1} parent=1 // pred_fallthru
      _
    // Predicated region
    $region30: #{tpu_custom_call.1} parent=1 // pred_check
      _
    $region31: #{tpu_custom_call.1} parent=1 // pred_check_branch
      %30 = sbr.rel (0) target = $region33
    $region32: #{tpu_custom_call.1} parent=1 // pred_region
      _
    $region33: #{tpu_custom_call.1} parent=1 // pred_fallthru
      _
    // Predicated region
    $region34: #{tpu_custom_call.1} parent=1 // pred_check
      _
    $region35: #{tpu_custom_call.1} parent=1 // pred_check_branch
      %32 = sbr.rel (0) target = $region37
    $region36: #{tpu_custom_call.1} parent=1 // pred_region
      _
    $region37: #{tpu_custom_call.1} parent=1 // pred_fallthru
      _
    %v34 = vld [vmem:[%s0] sm:$0xff]
    %v35 = vld [vmem:[%s0 + $0x8] sm:$0xff]
    %v36 = vlaneseq
    %v37 = vand.u32 %v36, 127
    %38 = vset.pattern.permute.xlu0 0
    %39 = vperm.xlu0 %38, %v34
    %v40 = vpop.permute.xlu0 %39
    %41 = vset.pattern.permute.xlu0 0
    %42 = vperm.xlu0 %41, %v35
    %v43 = vpop.permute.xlu0 %42
    %vm44 = vcmp.eq.s32.totalorder %v40, %v37
    %vm45 = vcmp.eq.s32.totalorder %v43, %v37
    %v46 = vsel %vm44, 1, 0
    %v47 = vsel %vm45, 1, 0
    %v48 = vcvt.s32.f32 %v46
    %v49 = vcvt.s32.f32 %v47
    %v50 = vpack.c.bf16 %v49, %v48
    %v51 = vld [vmem:[%s2] sm:$0xf]
    %v52 = vld [vmem:[%s2 + $0x4] sm:$0xf]
    %v53 = vld [vmem:[%s2 + $0x8] sm:$0xf]
    %v54 = vld [vmem:[%s2 + $0xc] sm:$0xf]
    %v55 = vld [vmem:[%s2 + $0x10] sm:$0xf]
    %v56 = vld [vmem:[%s2 + $0x14] sm:$0xf]
    %v57 = vld [vmem:[%s2 + $0x18] sm:$0xf]
    %s58 = smul.u32 0, 16
    %v59 = vlaneseq
    %v60 = vshrl.u32 %v59, 7
    %v61 = vadd.s32 %v60, 8
    %v62 = vstv %s58
    %v63 = vadd.s32 %v62, %v60
    %v64 = vadd.s32 %v62, %v61
    %v65 = vcvt.s32.f32 %v63
    %v66 = vcvt.s32.f32 %v64
    %v67 = vrcp.pop 8.0
    %v68 = vmul.f32 %v65, %v67
    %v69 = vmul.f32 %v66, %v67
    %v70 = vfloor.f32 %v68
    %v71 = vfloor.f32 %v69
    %v72 = vcvt.f32.s32.to.zero.pseudo %v70
    %v73 = vcvt.f32.s32.to.zero.pseudo %v71
    %v74 = vmul.u32 %v72, 8
    %v75 = vmul.u32 %v73, 8
    %v76 = vsub.s32 %v63, %v74
    %v77 = vsub.s32 %v64, %v75
    %vm78 = vcmp.lt.s32.totalorder %v76, 0
    %vm79 = vcmp.lt.s32.totalorder %v77, 0
    %v80 = vadd.s32 %v76, 8
    %v81 = vadd.s32 %v77, 8
    %v82 = vsel %vm78, %v80, %v76
    %v83 = vsel %vm79, %v81, %v77
    %vm84 = vcmp.ge.s32.totalorder %v82, 8
    %vm85 = vcmp.ge.s32.totalorder %v83, 8
    %v86 = vsub.s32 %v82, 8
    %v87 = vsub.s32 %v83, 8
    %v88 = vsel %vm84, %v86, %v82
    %v89 = vsel %vm85, %v87, %v83
    %vm90 = vcmp.eq.s32.totalorder %v88, %v37
    %vm91 = vcmp.eq.s32.totalorder %v89, %v37
    %v92 = vsel %vm90, 1, 0
    %v93 = vsel %vm91, 1, 0
    %v94 = vcvt.s32.f32 %v92
    %v95 = vcvt.s32.f32 %v93
    %v96 = vpack.c.bf16 %v95, %v94
    %v97 = vld [vmem:[%s3] sm:$0xf]
    %v98 = vld [vmem:[%s3 + $0x4] sm:$0xf]
    %v101 = vunpack.c.l.b16 %v97
    %v102 = vunpack.c.l.b16 %v98
    %v103 = vpack.c.b16 %v102, %v101
    %vm105 = vcmask 130048
    %v107 = vsel %vm105, %v96, 0
    %109 = vmatprep.subr.bf16.mxu0 0
    %110 = vmatpush1.bf16.msra.mxu0 0
    %111 = vmatprep.subr.bf16.mxu0 0
    %112 = vmatpush1.bf16.msra.mxu0 0
    %113 = vmatprep.subr.bf16.mxu0 0
    %114 = vmatpush1.bf16.msra.mxu0 0
    %115 = vmatprep.subr.bf16.mxu0 0
    %116 = vmatpush1.bf16.msra.mxu0 0
    %117 = vmatprep.subr.bf16.mxu0 0
    %118 = vmatpush1.bf16.msra.mxu0 0
    %119 = vmatprep.subr.bf16.mxu0 0
    %120 = vmatpush1.bf16.msra.mxu0 0
    %121 = vmatprep.subr.bf16.mxu0 0
    %122 = vmatpush1.bf16.msra.mxu0 0
    %123 = vmatprep.subr.bf16.mxu0 0
    %124 = vmatpush1.bf16.msra.mxu0 %v103
    %125 = vmatprep.subr.bf16.mxu0 0
    %126 = vmatpush2.bf16.msra.mxu0 0
    %127 = vmatprep.subr.bf16.mxu0 0
    %128 = vmatpush2.bf16.msra.mxu0 0
    %129 = vmatprep.subr.bf16.mxu0 0
    %130 = vmatpush2.bf16.msra.mxu0 0
    %131 = vmatprep.subr.bf16.mxu0 0
    %132 = vmatpush2.bf16.msra.mxu0 0
    %133 = vmatprep.subr.bf16.mxu0 0
    %134 = vmatpush2.bf16.msra.mxu0 0
    %135 = vmatprep.subr.bf16.mxu0 0
    %136 = vmatpush2.bf16.msra.mxu0 0
    %137 = vmatprep.subr.bf16.mxu0 0
    %138 = vmatpush2.bf16.msra.mxu0 0
    %139 = vmatprep.subr.bf16.mxu0 0
    %140 = vmatpush2.bf16.msra.mxu0 0
    %141 = vmatprep.mubr.bf16.mxu0 0
    %142 = vmatmul.mubr.bf16.gmra.mxu0 %v107
    %v143 = vpop.f32.mrf.mxu0
    %v144 = vadd.f32 0.0, %v143
    %v145 = vpop.f32.mrf.mxu0
    %v146 = vpop.f32.mrf.mxu0
    %v147 = vadd.f32 0.0, %v146
    %v148 = vpop.f32.mrf.mxu0
    %149 = vdwg.mxu0
    %v150 = vld [vmem:[%s1] sm:$0xff]
    %v151 = vld [vmem:[%s1 + $0x8] sm:$0xff]
    %152 = vset.pattern.permute.xlu0 0
    %153 = vperm.xlu0 %152, %v150
    %v154 = vpop.permute.xlu0 %153
    %155 = vset.pattern.permute.xlu0 0
    %156 = vperm.xlu0 %155, %v151
    %v157 = vpop.permute.xlu0 %156
    %vm158 = vcmp.eq.s32.totalorder %v154, %v37
    %vm159 = vcmp.eq.s32.totalorder %v157, %v37
    %v160 = vsel %vm158, 1, 0
    %v161 = vsel %vm159, 1, 0
    %v162 = vcvt.s32.f32 %v160
    %v163 = vcvt.s32.f32 %v161
    %v164 = vpack.c.bf16 %v163, %v162
    %v165 = vld [vmem:[%s4] sm:$0xf]
    %vm166 = vcmask 64512
    %v168 = vsel %vm166, %v164, 0
    %vm170 = vcmask 1043456
    %v172 = vsel %vm170, %v165, 0
    %174 = vmatprep.subr.bf16.mxu0 0
    %175 = vmatpush1.bf16.msra.mxu0 0
    %176 = vmatprep.subr.bf16.mxu0 0
    %177 = vmatpush1.bf16.msra.mxu0 0
    %178 = vmatprep.subr.bf16.mxu0 0
    %179 = vmatpush1.bf16.msra.mxu0 0
    %180 = vmatprep.subr.bf16.mxu0 0
    %181 = vmatpush1.bf16.msra.mxu0 0
    %182 = vmatprep.subr.bf16.mxu0 0
    %183 = vmatpush1.bf16.msra.mxu0 0
    %184 = vmatprep.subr.bf16.mxu0 0
    %185 = vmatpush1.bf16.msra.mxu0 0
    %186 = vmatprep.subr.bf16.mxu0 0
    %187 = vmatpush1.bf16.msra.mxu0 0
    %188 = vmatprep.subr.bf16.mxu0 0
    %189 = vmatpush1.bf16.msra.mxu0 %v172
    %190 = vmatprep.subr.bf16.mxu0 0
    %191 = vmatpush2.bf16.msra.mxu0 0
    %192 = vmatprep.subr.bf16.mxu0 0
    %193 = vmatpush2.bf16.msra.mxu0 0
    %194 = vmatprep.subr.bf16.mxu0 0
    %195 = vmatpush2.bf16.msra.mxu0 0
    %196 = vmatprep.subr.bf16.mxu0 0
    %197 = vmatpush2.bf16.msra.mxu0 0
    %198 = vmatprep.subr.bf16.mxu0 0
    %199 = vmatpush2.bf16.msra.mxu0 0
    %200 = vmatprep.subr.bf16.mxu0 0
    %201 = vmatpush2.bf16.msra.mxu0 0
    %202 = vmatprep.subr.bf16.mxu0 0
    %203 = vmatpush2.bf16.msra.mxu0 0
    %204 = vmatprep.subr.bf16.mxu0 0
    %205 = vmatpush2.bf16.msra.mxu0 0
    %206 = vmatprep.mubr.bf16.mxu0 0
    %207 = vmatmul.mubr.bf16.gmra.mxu0 %v168
    %v208 = vpop.f32.mrf.mxu0
    %v209 = vadd.f32 0.0, %v208
    %v210 = vpop.f32.mrf.mxu0
    %v211 = vpop.f32.mrf.mxu0
    %v212 = vadd.f32 0.0, %v211
    %v213 = vpop.f32.mrf.mxu0
    %214 = vdwg.mxu0
    %v222 = vunpack.c.l.b16 %v51
    %v223 = vunpack.c.l.b16 %v52
    %v224 = vunpack.c.l.b16 %v53
    %v225 = vunpack.c.l.b16 %v54
    %v226 = vunpack.c.l.b16 %v55
    %v227 = vunpack.c.l.b16 %v56
    %v228 = vunpack.c.l.b16 %v57
    %v229 = vpack.c.b16 %v223, %v222
    %v230 = vpack.c.b16 %v225, %v224
    %v231 = vpack.c.b16 %v227, %v226
    %v232 = vpack.c.b16 %v228, %v228
    %vm236 = vcmask 457728
    %v238 = vsel %vm236, %v50, 0
    %v241 = vsel %vm170, %v232, 0
    %243 = vmatprep.subr.bf16.mxu0 0
    %244 = vmatpush1.bf16.msra.mxu0 0
    %245 = vmatprep.subr.bf16.mxu0 0
    %246 = vmatpush1.bf16.msra.mxu0 0
    %247 = vmatprep.subr.bf16.mxu0 0
    %248 = vmatpush1.bf16.msra.mxu0 0
    %249 = vmatprep.subr.bf16.mxu0 0
    %250 = vmatpush1.bf16.msra.mxu0 0
    %251 = vmatprep.subr.bf16.mxu0 0
    %252 = vmatpush1.bf16.msra.mxu0 %v241
    %253 = vmatprep.subr.bf16.mxu0 0
    %254 = vmatpush1.bf16.msra.mxu0 %v231
    %255 = vmatprep.subr.bf16.mxu0 0
    %256 = vmatpush1.bf16.msra.mxu0 %v230
    %257 = vmatprep.subr.bf16.mxu0 0
    %258 = vmatpush1.bf16.msra.mxu0 %v229
    %259 = vmatprep.subr.bf16.mxu0 0
    %260 = vmatpush2.bf16.msra.mxu0 0
    %261 = vmatprep.subr.bf16.mxu0 0
    %262 = vmatpush2.bf16.msra.mxu0 0
    %263 = vmatprep.subr.bf16.mxu0 0
    %264 = vmatpush2.bf16.msra.mxu0 0
    %265 = vmatprep.subr.bf16.mxu0 0
    %266 = vmatpush2.bf16.msra.mxu0 0
    %267 = vmatprep.subr.bf16.mxu0 0
    %268 = vmatpush2.bf16.msra.mxu0 0
    %269 = vmatprep.subr.bf16.mxu0 0
    %270 = vmatpush2.bf16.msra.mxu0 0
    %271 = vmatprep.subr.bf16.mxu0 0
    %272 = vmatpush2.bf16.msra.mxu0 0
    %273 = vmatprep.subr.bf16.mxu0 0
    %274 = vmatpush2.bf16.msra.mxu0 0
    %275 = vmatprep.mubr.bf16.mxu0 0
    %276 = vmatmul.mubr.bf16.gmra.mxu0 %v238
    %v277 = vpop.f32.mrf.mxu0
    %v278 = vadd.f32 %v144, %v277
    %v279 = vpop.f32.mrf.mxu0
    %v280 = vpop.f32.mrf.mxu0
    %v281 = vadd.f32 %v147, %v280
    %v282 = vpop.f32.mrf.mxu0
    %283 = vdwg.mxu0
    %v284 = vadd.f32 %v278, %v209
    %v285 = vadd.f32 %v281, %v212
    %vm286 = vcmask 261120
    %v287 = vsel %vm286, %v284, 0.0
    %288 = vadd.xlane.f32.xlu0 %v287
    %v289 = vpop.xlane.xlu0 %288
    %v290 = vsel %vm286, %v285, 0.0
    %291 = vadd.xlane.f32.xlu0 %v290
    %v292 = vpop.xlane.xlu0 %291
    %v293 = vrcp.pop 32.0
    %v294 = vmul.f32 %v289, %v293
    %v295 = vmul.f32 %v292, %v293
    %v296 = vsub.f32 %v284, %v294
    %v297 = vsub.f32 %v285, %v295
    %v298 = vmul.f32 %v296, %v296
    %v299 = vmul.f32 %v297, %v297
    %v300 = vsel %vm286, %v298, 0.0
    %301 = vadd.xlane.f32.xlu0 %v300
    %v302 = vpop.xlane.xlu0 %301
    %v303 = vsel %vm286, %v299, 0.0
    %304 = vadd.xlane.f32.xlu0 %v303
    %v305 = vpop.xlane.xlu0 %304
    %v306 = vmul.f32 %v302, %v293
    %v307 = vmul.f32 %v305, %v293
    %v308 = vadd.f32 %v306, 1e-12
    %v309 = vadd.f32 %v307, 1e-12
    %v310 = vrsqrt.pop %v308
    %v311 = vrsqrt.pop %v309
    %v312 = vmul.f32 %v296, %v310
    %v313 = vmul.f32 %v297, %v311
    %v314 = vld [vmem:[%s5] sm:$0x1]
    %v316 = vlaneseq
    %v317 = vshrl.u32 %v316, 7
    %v318 = vsub.s32 0, %v317
    %v319 = vrot.slane %v314, %v318
    %v321 = vmul.f32 %v312, %v319
    %v322 = vmul.f32 %v313, %v319
    %v323 = vld [vmem:[%s6] sm:$0x1]
    %v325 = vlaneseq
    %v326 = vshrl.u32 %v325, 7
    %v327 = vsub.s32 0, %v326
    %v328 = vrot.slane %v323, %v327
    %v330 = vadd.f32 %v321, %v328
    %v331 = vadd.f32 %v322, %v328
    %v332 = vpack.c.bf16 %v331, %v330
    %v333 = vld [vmem:[%s7] sm:$0xf]
    %v334 = vld [vmem:[%s7 + $0x4] sm:$0xf]
    %v335 = vld [vmem:[%s7 + $0x8] sm:$0xf]
    %v336 = vld [vmem:[%s7 + $0xc] sm:$0xf]
    %v337 = vld [vmem:[%s8] sm:$0x1]
    %v339 = vlaneseq
    %v340 = vshrl.u32 %v339, 7
    %v341 = vsub.s32 0, %v340
    %v342 = vrot.slane %v337, %v341
    %v348 = vunpack.c.l.b16 %v333
    %v349 = vunpack.c.l.b16 %v334
    %v350 = vunpack.c.l.b16 %v335
    %v351 = vunpack.c.l.b16 %v336
    %v352 = vpack.c.b16 %v349, %v348
    %v353 = vpack.c.b16 %v351, %v350
    %v357 = vsel %vm286, %v332, 0
    %359 = vmatprep.subr.bf16.mxu0 0
    %360 = vmatpush1.bf16.msra.mxu0 0
    %361 = vmatprep.subr.bf16.mxu0 0
    %362 = vmatpush1.bf16.msra.mxu0 0
    %363 = vmatprep.subr.bf16.mxu0 0
    %364 = vmatpush1.bf16.msra.mxu0 0
    %365 = vmatprep.subr.bf16.mxu0 0
    %366 = vmatpush1.bf16.msra.mxu0 0
    %367 = vmatprep.subr.bf16.mxu0 0
    %368 = vmatpush1.bf16.msra.mxu0 0
    %369 = vmatprep.subr.bf16.mxu0 0
    %370 = vmatpush1.bf16.msra.mxu0 0
    %371 = vmatprep.subr.bf16.mxu0 0
    %372 = vmatpush1.bf16.msra.mxu0 %v353
    %373 = vmatprep.subr.bf16.mxu0 0
    %374 = vmatpush1.bf16.msra.mxu0 %v352
    %375 = vmatprep.subr.bf16.mxu0 0
    %376 = vmatpush2.bf16.msra.mxu0 0
    %377 = vmatprep.subr.bf16.mxu0 0
    %378 = vmatpush2.bf16.msra.mxu0 0
    %379 = vmatprep.subr.bf16.mxu0 0
    %380 = vmatpush2.bf16.msra.mxu0 0
    %381 = vmatprep.subr.bf16.mxu0 0
    %382 = vmatpush2.bf16.msra.mxu0 0
    %383 = vmatprep.subr.bf16.mxu0 0
    %384 = vmatpush2.bf16.msra.mxu0 0
    %385 = vmatprep.subr.bf16.mxu0 0
    %386 = vmatpush2.bf16.msra.mxu0 0
    %387 = vmatprep.subr.bf16.mxu0 0
    %388 = vmatpush2.bf16.msra.mxu0 0
    %389 = vmatprep.subr.bf16.mxu0 0
    %390 = vmatpush2.bf16.msra.mxu0 0
    %391 = vmatprep.mubr.bf16.mxu0 0
    %392 = vmatmul.mubr.bf16.gmra.mxu0 %v357
    %v393 = vpop.f32.mrf.mxu0
    %v394 = vadd.f32 %v342, %v393
    %v395 = vpop.f32.mrf.mxu0
    %v396 = vpop.f32.mrf.mxu0
    %v397 = vadd.f32 %v342, %v396
    %v398 = vpop.f32.mrf.mxu0
    %399 = vdwg.mxu0
    %v400 = vpack.c.bf16 %v397, %v394
    %v402 = vunpack.c.l.b16 %v400
    %v403 = vunpack.c.h.b16 %v400
    %v404 = vpack.c.b16 %v402, %v402
    %v405 = vpack.c.b16 %v403, %v403
    %408 = vst [vmem:[#allocation2] sm:$0xf] %v404
    %409 = vst [vmem:[#allocation2 + $0x4] sm:$0xf] %v405
    // Predicated region
    $region38: #{tpu_custom_call.1} parent=1 // pred_check
      _
    $region39: #{tpu_custom_call.1} parent=1 // pred_check_branch
      %411 = sbr.rel (0) target = $region41
    $region40: #{tpu_custom_call.1} parent=1 // pred_region
      %s413 = ssub.s32 128, 128
      %414 = vsyncadd [#allocation3], %s413
      %s415 = sshll.u32 [#allocation2], 4
      %s416 = int_to_ptr.vmem [resolvable:$true] %s415
      %421 = dma.vmem_to_hbm [thread:$0]  %s416, 128, %s9, [#allocation3], 64, 64, 4
    $region41: #{tpu_custom_call.1} parent=1 // pred_fallthru
      _
    // Predicated region
    $region42: #{tpu_custom_call.1} parent=1 // pred_check
      _
    $region43: #{tpu_custom_call.1} parent=1 // pred_check_branch
      %423 = sbr.rel (0) target = $region45
    $region44: #{tpu_custom_call.1} parent=1 // pred_region
      %424 = dma.done [#allocation3], 128
    $region45: #{tpu_custom_call.1} parent=1 // pred_fallthru
      _
    %425 = vsyncpa [#allocation3], 1

</llo_original>
